<compile_context>
chip_gen: v6e
topology: v6e:2x2x1
jax: 0.10.0
libtpu: 0.0.40
codegen_flags: <defaults>
</compile_context>

<pallas_src>
import functools

import numpy as np
import jax
import jax.numpy as jnp
from jax import lax
from jax.experimental import pallas as pl
from jax.experimental.pallas import tpu as pltpu


_MAX_TILE = 256  # row/col tile (multiple of 8 and 128); ~MB-scale VMEM per tile


def _round_up(x, m):
    return ((x + m - 1) // m) * m


def _pad_sizes(n, d, max_tile=_MAX_TILE):
    n_pad = _round_up(max(n, 8), 8)
    if n_pad > max_tile:
        n_pad = _round_up(n_pad, max_tile)
        tile = max_tile
    else:
        tile = n_pad
    d_pad = _round_up(max(d, 128), 128)
    return n_pad, d_pad, tile


# -----------------------------------------------------------------------------
# Pallas kernel: fused normalize -> tiled sim block -> masked NormSoftmaxLoss
# grid = (pair, row_tile, col_tile); col_tile is innermost.
# -----------------------------------------------------------------------------
def _normsoftmax_pair_kernel(counts_ref,      # SMEM (P,) int32  (scalar prefetch)
                             a_ref,           # VMEM (1, T, Dp)  rows of embed1
                             b_ref,           # VMEM (1, T, Dp)  rows of embed2
                             rmask_ref,       # VMEM (1, T, 1)   row-tile validity
                             cmask_ref,       # VMEM (1, 1, T)   col-tile validity
                             out_ref,         # VMEM (1, 8, 128) per-pair loss
                             row_acc_ref,     # VMEM (T, 1)  f32 scratch
                             col_acc_ref,     # VMEM (nt, 1, T) f32 scratch
                             acc_ref,         # SMEM (1,) f32 scalar accumulator
                             *, inv_temp, eps, matmul_dtype):
    p = pl.program_id(0)
    r = pl.program_id(1)
    c = pl.program_id(2)
    nr = pl.num_programs(1)
    nc = pl.num_programs(2)

    @pl.when(jnp.logical_and(r == 0, c == 0))
    def _init_pair():
        acc_ref[0] = jnp.float32(0.0)
        col_acc_ref[...] = jnp.zeros_like(col_acc_ref)

    @pl.when(c == 0)
    def _init_row_tile():
        row_acc_ref[...] = jnp.zeros_like(row_acc_ref)

    a = a_ref[0].astype(jnp.float32)           # (T, Dp)
    b = b_ref[0].astype(jnp.float32)           # (T, Dp)
    rmask = rmask_ref[0].astype(jnp.float32)   # (T, 1)  1.0 = valid row
    cmask = cmask_ref[0].astype(jnp.float32)   # (1, T)  1.0 = valid col

    # Row L2 normalization (exact divide: approx reciprocal would get amplified
    # by 1/temperature). Fold 1/temperature into A's scale so the N^2 block
    # needs no further scaling pass.
    a_nrm = jnp.sqrt(jnp.sum(a * a, axis=1, keepdims=True))
    a_s = a * (inv_temp / jnp.maximum(a_nrm, eps))
    b_nrm = jnp.sqrt(jnp.sum(b * b, axis=1, keepdims=True))
    b_n = b * (1.0 / jnp.maximum(b_nrm, eps))

    # x = cos_sim / temperature for this (row-tile, col-tile) block (MXU).
    x = lax.dot_general(a_s.astype(matmul_dtype), b_n.astype(matmul_dtype),
                        (((1,), (1,)), ((), ())),
                        preferred_element_type=jnp.float32)      # (T, T)

    # |cos| <= 1  =>  x <= inv_temp. One exp pass with constant offset C serves
    # both softmax directions; padded rows/cols contribute exactly 0.
    C = jnp.float32(inv_temp)
    e = jnp.exp(x - C) * cmask * rmask

    row_acc_ref[...] += jnp.sum(e, axis=1, keepdims=True)         # (T, 1)
    col_acc_ref[c] += jnp.sum(e, axis=0, keepdims=True)           # (1, T)

    # Diagonal of x via a row-wise dot (only when row tile == col tile).
    @pl.when(r == c)
    def _diag():
        d = jnp.sum(a_s * b_n, axis=1, keepdims=True) * rmask     # (T, 1)
        acc_ref[0] += -2.0 * jnp.sum(d)

    # Row-direction logsumexp finalization for this row tile.
    @pl.when(c == nc - 1)
    def _row_fin():
        lse = jnp.where(rmask > 0.0, jnp.log(row_acc_ref[...]) + C, 0.0)
        acc_ref[0] += jnp.sum(lse)

    # Column-direction logsumexp finalization for this col tile.
    @pl.when(r == nr - 1)
    def _col_fin():
        lse = jnp.where(cmask > 0.0, jnp.log(col_acc_ref[c]) + C, 0.0)
        acc_ref[0] += jnp.sum(lse)

    # loss = (sum_lse_row + sum_lse_col - 2*sum_diag) / n  at the last step.
    @pl.when(jnp.logical_and(r == nr - 1, c == nc - 1))
    def _write_out():
        n = counts_ref[p].astype(jnp.float32)
        loss = acc_ref[0] / n
        out_ref[...] = jnp.broadcast_to(loss, out_ref.shape).astype(out_ref.dtype)


def _pallas_normsoftmax_losses(e1, e2, mask, counts, *, temperature, tile,
                               eps=1e-8, matmul_dtype=jnp.float32):
    """e1, e2: (P, Np, Dp) zero-padded embeddings; mask: (P, Np) 0/1 float32;
    counts: (P,) int32 number of valid rows per pair. Returns (P,) losses."""
    P, Np, Dp = e1.shape
    nt = Np // tile
    assert nt * tile == Np

    rmask = mask.reshape(P, Np, 1)
    cmask = mask.reshape(P, 1, Np)

    kernel = functools.partial(_normsoftmax_pair_kernel,
                               inv_temp=float(1.0 / temperature),
                               eps=float(eps), matmul_dtype=matmul_dtype)

    out = pl.pallas_call(
        kernel,
        out_shape=jax.ShapeDtypeStruct((P, 8, 128), jnp.float32),
        grid_spec=pltpu.PrefetchScalarGridSpec(
            num_scalar_prefetch=1,
            grid=(P, nt, nt),
            in_specs=[
                pl.BlockSpec((1, tile, Dp), lambda p, r, c, cnt: (p, r, 0)),
                pl.BlockSpec((1, tile, Dp), lambda p, r, c, cnt: (p, c, 0)),
                pl.BlockSpec((1, tile, 1), lambda p, r, c, cnt: (p, r, 0)),
                pl.BlockSpec((1, 1, tile), lambda p, r, c, cnt: (p, 0, c)),
            ],
            out_specs=pl.BlockSpec((1, 8, 128), lambda p, r, c, cnt: (p, 0, 0)),
            scratch_shapes=[
                pltpu.VMEM((tile, 1), jnp.float32),       # per-row exp sums
                pltpu.VMEM((nt, 1, tile), jnp.float32),   # per-col exp sums
                pltpu.SMEM((1,), jnp.float32),            # scalar loss accumulator
            ],
        ),
        compiler_params=pltpu.CompilerParams(
            dimension_semantics=("parallel", "arbitrary", "arbitrary")),
    )(counts, e1, e2, rmask, cmask)
    return out[:, 0, 0]


# -----------------------------------------------------------------------------
# CombinatorialLoss wrapper (static shapes, in-kernel masking, one kernel call)
# -----------------------------------------------------------------------------
class CombinatorialLossPallas:
    def __init__(self, contrastive_loss='NormSoftmax', temperature=0.05,
                 tv_weight=0, ta_weight=0, va_weight=0,
                 t_va_weight=0, v_ta_weight=0, a_tv_weight=0,
                 matmul_dtype=jnp.float32):
        if contrastive_loss != 'NormSoftmax':
            # TODO(synk): MMS_Loss variant not wired up (same kernel structure with a
            # margin subtraction on the diagonal term would cover it).
            raise NotImplementedError()
        self.temperature = temperature
        self.matmul_dtype = matmul_dtype  # jnp.bfloat16 for native MXU rate
        self.tv_weight = tv_weight
        self.ta_weight = ta_weight
        self.va_weight = va_weight
        self.t_va_weight = t_va_weight
        self.v_ta_weight = v_ta_weight
        self.a_tv_weight = a_tv_weight

    def __call__(self, input_data):
        t = np.asarray(input_data['text_nonempty_input_mask'])
        v = np.asarray(input_data['video_nonempty_input_mask'])
        a = np.asarray(input_data['audio_nonempty_input_mask'])
        nonempty = {
            'tv': t & v, 'ta': t & a, 'va': v & a,
            't_va': t & (v & a), 'v_ta': v & (t & a), 'a_tv': a & (t & v),
        }
        pair_defs = [
            ('tv', 'text_embed', 'video_embed', self.tv_weight),
            ('ta', 'text_embed', 'audio_embed', self.ta_weight),
            ('va', 'video_embed', 'audio_embed', self.va_weight),
            ('t_va', 'text_embed', 'va_embed', self.t_va_weight),
            ('v_ta', 'video_embed', 'ta_embed', self.v_ta_weight),
            ('a_tv', 'audio_embed', 'tv_embed', self.a_tv_weight),
        ]
        active = []
        for name, e1n, e2n, w in pair_defs:
            if e1n in input_data and e2n in input_data and w != 0:
                m = nonempty[name]
                cnt = int(m.sum())
                if cnt == 0:
                    # Degenerate pair (reference would log-softmax an empty matrix).
                    continue
                active.append((name, e1n, e2n, float(w), m, cnt))
        if not active:
            raise ValueError('CombinatorialLoss: no active modality pair '
                             '(all weights zero or all masks empty).')

        N = int(t.shape[0])
        D = int(jnp.asarray(input_data[active[0][1]]).shape[1])
        n_pad, d_pad, tile = _pad_sizes(N, D)

        padded = {}

        def _get(name):
            if name not in padded:
                e = jnp.asarray(input_data[name], dtype=jnp.float32)
                padded[name] = jnp.pad(e, ((0, n_pad - N), (0, d_pad - D)))
            return padded[name]

        e1_stack = jnp.stack([_get(e1n) for (_, e1n, _, _, _, _) in active])
        e2_stack = jnp.stack([_get(e2n) for (_, _, e2n, _, _, _) in active])

        mask_np = np.zeros((len(active), n_pad), np.float32)
        for i, (_, _, _, _, m, _) in enumerate(active):
            mask_np[i, :N] = m.astype(np.float32)
        counts_np = np.array([cnt for (_, _, _, _, _, cnt) in active], np.int32)

        losses = _pallas_normsoftmax_losses(
            e1_stack, e2_stack, jnp.asarray(mask_np), jnp.asarray(counts_np),
            temperature=self.temperature, tile=tile,
            matmul_dtype=self.matmul_dtype)

        weights = jnp.asarray([w for (_, _, _, w, _, _) in active], jnp.float32)
        weight_sum = float(sum(w for (_, _, _, w, _, _) in active))
        final_loss = jnp.dot(weights, losses) / weight_sum

        # Single device->host transfer for the info dict.
        losses_host = np.asarray(losses)
        loss_info = {name: float(l)
                     for (name, _, _, _, _, _), l in zip(active, losses_host)}
        loss_info['Retrieval'] = float(final_loss)
        return final_loss, loss_info


# -----------------------------------------------------------------------------
# Pure-JAX reference (mirrors the PyTorch forward for a correctness check)
# -----------------------------------------------------------------------------
def _ref_normsoftmax(e1, e2, temperature=0.05, eps=1e-8):
    def norm(x):
        n = jnp.linalg.norm(x, axis=1, keepdims=True)
        return x / jnp.maximum(n, eps)
    s = norm(e1) @ norm(e2).T
    i_logsm = jax.nn.log_softmax(s / temperature, axis=1)
    j_logsm = jax.nn.log_softmax(s.T / temperature, axis=1)
    return -jnp.mean(jnp.diag(i_logsm)) - jnp.mean(jnp.diag(j_logsm))


if __name__ == "__main__":
    key = jax.random.PRNGKey(0)
    N, D = 8, 32
    ks = jax.random.split(key, 6)
    text_embed = jax.random.normal(ks[0], (N, D), jnp.float32)
    video_embed = jax.random.normal(ks[1], (N, D), jnp.float32)
    audio_embed = jax.random.normal(ks[2], (N, D), jnp.float32)
    va_embed = jax.random.normal(ks[3], (N, D), jnp.float32)
    ta_embed = jax.random.normal(ks[4], (N, D), jnp.float32)
    tv_embed = jax.random.normal(ks[5], (N, D), jnp.float32)

    text_mask = np.ones(N, dtype=bool)
    video_mask = np.ones(N, dtype=bool); video_mask[7] = False
    audio_mask = np.ones(N, dtype=bool); audio_mask[3] = False

    input_data = {
        'text_embed': text_embed, 'video_embed': video_embed,
        'audio_embed': audio_embed, 'va_embed': va_embed,
        'ta_embed': ta_embed, 'tv_embed': tv_embed,
        'text_nonempty_input_mask': text_mask,
        'video_nonempty_input_mask': video_mask,
        'audio_nonempty_input_mask': audio_mask,
    }

    loss_mod = CombinatorialLossPallas(
        contrastive_loss='NormSoftmax', temperature=0.05,
        tv_weight=1.0, ta_weight=1.0, va_weight=1.0,
        t_va_weight=0.5, v_ta_weight=0.5, a_tv_weight=0.5)

    final_loss, loss_info = loss_mod(input_data)
    final_loss = jax.block_until_ready(final_loss)

    # Sanity check against a pure-JAX reference of the whole forward
    # (masked-row compaction like the PyTorch module).
    ref_sum, ref_wsum = 0.0, 0.0
    for name, e1, e2, w in [
        ('tv', text_embed, video_embed, 1.0), ('ta', text_embed, audio_embed, 1.0),
        ('va', video_embed, audio_embed, 1.0), ('t_va', text_embed, va_embed, 0.5),
        ('v_ta', video_embed, ta_embed, 0.5), ('a_tv', audio_embed, tv_embed, 0.5),
    ]:
        m = {'tv': text_mask & video_mask, 'ta': text_mask & audio_mask,
             'va': video_mask & audio_mask,
             't_va': text_mask & video_mask & audio_mask,
             'v_ta': text_mask & video_mask & audio_mask,
             'a_tv': text_mask & video_mask & audio_mask}[name]
        ref_sum += w * _ref_normsoftmax(jnp.asarray(np.asarray(e1)[m]),
                                        jnp.asarray(np.asarray(e2)[m]))
        ref_wsum += w
    ref_loss = ref_sum / ref_wsum
    np.testing.assert_allclose(np.asarray(final_loss), np.asarray(ref_loss),
                               rtol=1e-3, atol=1e-3)
    print("KERNEL_OK")
</pallas_src>

<mosaic_0001>
module attributes {stable_mosaic.version = 11 : i64} {
  func.func @_normsoftmax_pair_kernel(%arg0: i32, %arg1: i32, %arg2: i32, %arg3: memref<6xi32, #tpu.memory_space<smem>>, %arg4: memref<1x8x128xf32, #tpu.memory_space<vmem>>, %arg5: memref<1x8x128xf32, #tpu.memory_space<vmem>>, %arg6: memref<1x8x1xf32, #tpu.memory_space<vmem>>, %arg7: memref<1x1x8xf32, #tpu.memory_space<vmem>>, %arg8: memref<1x8x128xf32, #tpu.memory_space<vmem>>, %arg9: memref<8x1xf32, #tpu.memory_space<vmem>>, %arg10: memref<1x1x8xf32, #tpu.memory_space<vmem>>, %arg11: memref<1xf32, #tpu.memory_space<smem>>) attributes {dimension_semantics = [#tpu.dimension_semantics<parallel>, #tpu.dimension_semantics<arbitrary>, #tpu.dimension_semantics<arbitrary>], iteration_bounds = array<i64: 6, 1, 1>, scalar_prefetch = 1 : i64, scratch_operands = 3 : i64, tpu.core_type = #tpu.core_type<tc>, window_params = [{transform_indices = @transform_0, window_bounds = array<i64: 1, 8, 128>}, {transform_indices = @transform_1, window_bounds = array<i64: 1, 8, 128>}, {transform_indices = @transform_2, window_bounds = array<i64: 1, 8, 1>}, {transform_indices = @transform_3, window_bounds = array<i64: 1, 1, 8>}, {transform_indices = @transform_4, window_bounds = array<i64: 1, 8, 128>}]} {
    %c0_i32 = arith.constant 0 : i32
    %0 = arith.cmpi eq, %arg1, %c0_i32 : i32
    %c0_i32_0 = arith.constant 0 : i32
    %1 = arith.cmpi eq, %arg2, %c0_i32_0 : i32
    %2 = arith.andi %0, %1 : i1
    %3 = arith.extui %2 : i1 to i32
    %c0_i32_1 = arith.constant 0 : i32
    %4 = arith.cmpi ne, %3, %c0_i32_1 : i32
    scf.if %4 {
      %cst_42 = arith.constant 0.000000e+00 : f32
      %c0_43 = arith.constant 0 : index
      %73 = memref.load %arg11[%c0_43] : memref<1xf32, #tpu.memory_space<smem>>
      memref.store %cst_42, %arg11[%c0_43] : memref<1xf32, #tpu.memory_space<smem>>
      %cst_44 = arith.constant 0.000000e+00 : f32
      %74 = vector.broadcast %cst_44 : f32 to vector<1x1x8xf32>
      %c0_45 = arith.constant 0 : index
      %c0_46 = arith.constant 0 : index
      %c0_47 = arith.constant 0 : index
      %75 = vector.load %arg10[%c0_45, %c0_46, %c0_47] : memref<1x1x8xf32, #tpu.memory_space<vmem>>, vector<1x1x8xf32>
      tpu.vector_store %arg10[%c0_45, %c0_46, %c0_47], %74 {strides = array<i32>} : memref<1x1x8xf32, #tpu.memory_space<vmem>>, vector<1x1x8xf32>,
    } else {
    }
    %c0_i32_2 = arith.constant 0 : i32
    %5 = arith.cmpi eq, %arg2, %c0_i32_2 : i32
    %6 = arith.extui %5 : i1 to i32
    %c0_i32_3 = arith.constant 0 : i32
    %7 = arith.cmpi ne, %6, %c0_i32_3 : i32
    scf.if %7 {
      %cst_42 = arith.constant 0.000000e+00 : f32
      %73 = vector.broadcast %cst_42 : f32 to vector<8x1xf32>
      %c0_43 = arith.constant 0 : index
      %c0_44 = arith.constant 0 : index
      %74 = vector.load %arg9[%c0_43, %c0_44] : memref<8x1xf32, #tpu.memory_space<vmem>>, vector<8x1xf32>
      tpu.vector_store %arg9[%c0_43, %c0_44], %73 {strides = array<i32>} : memref<8x1xf32, #tpu.memory_space<vmem>>, vector<8x1xf32>,
    } else {
    }
    %c0 = arith.constant 0 : index
    %c0_4 = arith.constant 0 : index
    %c0_5 = arith.constant 0 : index
    %8 = vector.load %arg4[%c0, %c0_4, %c0_5] : memref<1x8x128xf32, #tpu.memory_space<vmem>>, vector<1x8x128xf32>
    %9 = vector.shape_cast %8 : vector<1x8x128xf32> to vector<8x128xf32>
    %c0_6 = arith.constant 0 : index
    %c0_7 = arith.constant 0 : index
    %c0_8 = arith.constant 0 : index
    %10 = vector.load %arg5[%c0_6, %c0_7, %c0_8] : memref<1x8x128xf32, #tpu.memory_space<vmem>>, vector<1x8x128xf32>
    %11 = vector.shape_cast %10 : vector<1x8x128xf32> to vector<8x128xf32>
    %c0_9 = arith.constant 0 : index
    %c0_10 = arith.constant 0 : index
    %c0_11 = arith.constant 0 : index
    %12 = vector.load %arg6[%c0_9, %c0_10, %c0_11] : memref<1x8x1xf32, #tpu.memory_space<vmem>>, vector<1x8x1xf32>
    %13 = vector.shape_cast %12 : vector<1x8x1xf32> to vector<8x1xf32>
    %c0_12 = arith.constant 0 : index
    %c0_13 = arith.constant 0 : index
    %c0_14 = arith.constant 0 : index
    %14 = vector.load %arg7[%c0_12, %c0_13, %c0_14] : memref<1x1x8xf32, #tpu.memory_space<vmem>>, vector<1x1x8xf32>
    %15 = vector.shape_cast %14 : vector<1x1x8xf32> to vector<1x8xf32>
    %16 = arith.mulf %9, %9 : vector<8x128xf32>
    %cst = arith.constant dense<0.000000e+00> : vector<8xf32>
    %17 = vector.multi_reduction <add>, %16, %cst [1] : vector<8x128xf32> to vector<8xf32>
    %18 = vector.shape_cast %17 : vector<8xf32> to vector<8x1xf32>
    %19 = math.sqrt %18 : vector<8x1xf32>
    %cst_15 = arith.constant 9.99999993E-9 : f32
    %20 = vector.broadcast %cst_15 : f32 to vector<8x1xf32>
    %21 = arith.maximumf %19, %20 : vector<8x1xf32>
    %cst_16 = arith.constant 2.000000e+01 : f32
    %22 = vector.broadcast %cst_16 : f32 to vector<8x1xf32>
    %23 = arith.divf %22, %21 : vector<8x1xf32>
    %24 = vector.broadcast %23 : vector<8x1xf32> to vector<8x128xf32>
    %25 = arith.mulf %9, %24 : vector<8x128xf32>
    %26 = arith.mulf %11, %11 : vector<8x128xf32>
    %cst_17 = arith.constant dense<0.000000e+00> : vector<8xf32>
    %27 = vector.multi_reduction <add>, %26, %cst_17 [1] : vector<8x128xf32> to vector<8xf32>
    %28 = vector.shape_cast %27 : vector<8xf32> to vector<8x1xf32>
    %29 = math.sqrt %28 : vector<8x1xf32>
    %cst_18 = arith.constant 9.99999993E-9 : f32
    %30 = vector.broadcast %cst_18 : f32 to vector<8x1xf32>
    %31 = arith.maximumf %29, %30 : vector<8x1xf32>
    %cst_19 = arith.constant 1.000000e+00 : f32
    %32 = vector.broadcast %cst_19 : f32 to vector<8x1xf32>
    %33 = arith.divf %32, %31 : vector<8x1xf32>
    %34 = vector.broadcast %33 : vector<8x1xf32> to vector<8x128xf32>
    %35 = arith.mulf %11, %34 : vector<8x128xf32>
    %cst_20 = arith.constant dense<0.000000e+00> : vector<8x8xf32>
    %36 = tpu.matmul %25, %35, %cst_20 {dimension_numbers = #tpu.dot_dimension_numbers<[1], [1], [0], [0], [0, 0, 1, 0], [], []>} : vector<8x128xf32>, vector<8x128xf32>, vector<8x8xf32> -> vector<8x8xf32>
    %cst_21 = arith.constant 2.000000e+01 : f32
    %37 = vector.broadcast %cst_21 : f32 to vector<8x8xf32>
    %38 = arith.subf %36, %37 : vector<8x8xf32>
    %39 = math.exp %38 : vector<8x8xf32>
    %40 = vector.broadcast %15 : vector<1x8xf32> to vector<8x8xf32>
    %41 = arith.mulf %39, %40 : vector<8x8xf32>
    %42 = vector.broadcast %13 : vector<8x1xf32> to vector<8x8xf32>
    %43 = arith.mulf %41, %42 : vector<8x8xf32>
    %c0_22 = arith.constant 0 : index
    %c0_23 = arith.constant 0 : index
    %44 = vector.load %arg9[%c0_22, %c0_23] : memref<8x1xf32, #tpu.memory_space<vmem>>, vector<8x1xf32>
    %cst_24 = arith.constant dense<0.000000e+00> : vector<8xf32>
    %45 = vector.multi_reduction <add>, %43, %cst_24 [1] : vector<8x8xf32> to vector<8xf32>
    %46 = vector.shape_cast %45 : vector<8xf32> to vector<8x1xf32>
    %47 = arith.addf %44, %46 : vector<8x1xf32>
    %c0_25 = arith.constant 0 : index
    %c0_26 = arith.constant 0 : index
    %48 = vector.load %arg9[%c0_25, %c0_26] : memref<8x1xf32, #tpu.memory_space<vmem>>, vector<8x1xf32>
    tpu.vector_store %arg9[%c0_25, %c0_26], %47 {strides = array<i32>} : memref<8x1xf32, #tpu.memory_space<vmem>>, vector<8x1xf32>,
    %49 = arith.index_cast %arg2 : i32 to index
    %c0_27 = arith.constant 0 : index
    %c0_28 = arith.constant 0 : index
    %50 = vector.load %arg10[%49, %c0_27, %c0_28] : memref<1x1x8xf32, #tpu.memory_space<vmem>>, vector<1x1x8xf32>
    %51 = vector.shape_cast %50 : vector<1x1x8xf32> to vector<1x8xf32>
    %cst_29 = arith.constant dense<0.000000e+00> : vector<8xf32>
    %52 = vector.multi_reduction <add>, %43, %cst_29 [0] : vector<8x8xf32> to vector<8xf32>
    %53 = vector.shape_cast %52 : vector<8xf32> to vector<1x8xf32>
    %54 = arith.addf %51, %53 : vector<1x8xf32>
    %55 = arith.index_cast %arg2 : i32 to index
    %c0_30 = arith.constant 0 : index
    %c0_31 = arith.constant 0 : index
    %56 = vector.load %arg10[%55, %c0_30, %c0_31] : memref<1x1x8xf32, #tpu.memory_space<vmem>>, vector<1x1x8xf32>
    %57 = vector.shape_cast %56 : vector<1x1x8xf32> to vector<1x8xf32>
    %58 = vector.shape_cast %54 : vector<1x8xf32> to vector<1x1x8xf32>
    tpu.vector_store %arg10[%55, %c0_30, %c0_31], %58 {strides = array<i32>} : memref<1x1x8xf32, #tpu.memory_space<vmem>>, vector<1x1x8xf32>,
    %59 = arith.cmpi eq, %arg1, %arg2 : i32
    %60 = arith.extui %59 : i1 to i32
    %c0_i32_32 = arith.constant 0 : i32
    %61 = arith.cmpi ne, %60, %c0_i32_32 : i32
    scf.if %61 {
      %73 = arith.mulf %25, %35 : vector<8x128xf32>
      %cst_42 = arith.constant dense<0.000000e+00> : vector<8xf32>
      %74 = vector.multi_reduction <add>, %73, %cst_42 [1] : vector<8x128xf32> to vector<8xf32>
      %75 = vector.shape_cast %74 : vector<8xf32> to vector<8x1xf32>
      %76 = arith.mulf %75, %13 : vector<8x1xf32>
      %c0_43 = arith.constant 0 : index
      %77 = memref.load %arg11[%c0_43] : memref<1xf32, #tpu.memory_space<smem>>
      %78 = vector.shape_cast %76 : vector<8x1xf32> to vector<1x8x1xf32>
      %cst_44 = arith.constant dense<0.000000e+00> : vector<1xf32>
      %79 = vector.multi_reduction <add>, %78, %cst_44 [1, 2] : vector<1x8x1xf32> to vector<1xf32>
      %80 = vector.shape_cast %79 : vector<1xf32> to vector<1x1x1xf32>
      %81 = vector.extract %80[0, 0, 0] : f32 from vector<1x1x1xf32>
      %cst_45 = arith.constant -2.000000e+00 : f32
      %82 = arith.mulf %cst_45, %81 : f32
      %83 = arith.addf %77, %82 : f32
      %c0_46 = arith.constant 0 : index
      %84 = memref.load %arg11[%c0_46] : memref<1xf32, #tpu.memory_space<smem>>
      memref.store %83, %arg11[%c0_46] : memref<1xf32, #tpu.memory_space<smem>>
    } else {
    }
    %c0_i32_33 = arith.constant 0 : i32
    %62 = arith.cmpi eq, %arg2, %c0_i32_33 : i32
    %63 = arith.extui %62 : i1 to i32
    %cst_34 = arith.constant 2.000000e+01 : f32
    %c0_i32_35 = arith.constant 0 : i32
    %64 = arith.cmpi ne, %63, %c0_i32_35 : i32
    scf.if %64 {
      %cst_42 = arith.constant 0.000000e+00 : f32
      %73 = vector.broadcast %cst_42 : f32 to vector<8x1xf32>
      %74 = arith.cmpf ogt, %13, %73 : vector<8x1xf32>
      %c0_43 = arith.constant 0 : index
      %c0_44 = arith.constant 0 : index
      %75 = vector.load %arg9[%c0_43, %c0_44] : memref<8x1xf32, #tpu.memory_space<vmem>>, vector<8x1xf32>
      %76 = math.log %75 : vector<8x1xf32>
      %77 = vector.broadcast %cst_34 : f32 to vector<8x1xf32>
      %78 = arith.addf %76, %77 : vector<8x1xf32>
      %cst_45 = arith.constant 0.000000e+00 : f32
      %79 = vector.broadcast %cst_45 : f32 to vector<8x1xf32>
      %80 = arith.select %74, %78, %79 : vector<8x1xi1>, vector<8x1xf32>
      %c0_46 = arith.constant 0 : index
      %81 = memref.load %arg11[%c0_46] : memref<1xf32, #tpu.memory_space<smem>>
      %82 = vector.shape_cast %80 : vector<8x1xf32> to vector<1x8x1xf32>
      %cst_47 = arith.constant dense<0.000000e+00> : vector<1xf32>
      %83 = vector.multi_reduction <add>, %82, %cst_47 [1, 2] : vector<1x8x1xf32> to vector<1xf32>
      %84 = vector.shape_cast %83 : vector<1xf32> to vector<1x1x1xf32>
      %85 = vector.extract %84[0, 0, 0] : f32 from vector<1x1x1xf32>
      %86 = arith.addf %81, %85 : f32
      %c0_48 = arith.constant 0 : index
      %87 = memref.load %arg11[%c0_48] : memref<1xf32, #tpu.memory_space<smem>>
      memref.store %86, %arg11[%c0_48] : memref<1xf32, #tpu.memory_space<smem>>
    } else {
    }
    %c0_i32_36 = arith.constant 0 : i32
    %65 = arith.cmpi eq, %arg1, %c0_i32_36 : i32
    %66 = arith.extui %65 : i1 to i32
    %cst_37 = arith.constant 2.000000e+01 : f32
    %c0_i32_38 = arith.constant 0 : i32
    %67 = arith.cmpi ne, %66, %c0_i32_38 : i32
    scf.if %67 {
      %cst_42 = arith.constant 0.000000e+00 : f32
      %73 = vector.broadcast %cst_42 : f32 to vector<1x8xf32>
      %74 = arith.cmpf ogt, %15, %73 : vector<1x8xf32>
      %75 = arith.index_cast %arg2 : i32 to index
      %c0_43 = arith.constant 0 : index
      %c0_44 = arith.constant 0 : index
      %76 = vector.load %arg10[%75, %c0_43, %c0_44] : memref<1x1x8xf32, #tpu.memory_space<vmem>>, vector<1x1x8xf32>
      %77 = vector.shape_cast %76 : vector<1x1x8xf32> to vector<1x8xf32>
      %78 = math.log %77 : vector<1x8xf32>
      %79 = vector.broadcast %cst_37 : f32 to vector<1x8xf32>
      %80 = arith.addf %78, %79 : vector<1x8xf32>
      %cst_45 = arith.constant 0.000000e+00 : f32
      %81 = vector.broadcast %cst_45 : f32 to vector<1x8xf32>
      %82 = arith.select %74, %80, %81 : vector<1x8xi1>, vector<1x8xf32>
      %c0_46 = arith.constant 0 : index
      %83 = memref.load %arg11[%c0_46] : memref<1xf32, #tpu.memory_space<smem>>
      %84 = vector.shape_cast %82 : vector<1x8xf32> to vector<1x1x8xf32>
      %cst_47 = arith.constant dense<0.000000e+00> : vector<1xf32>
      %85 = vector.multi_reduction <add>, %84, %cst_47 [1, 2] : vector<1x1x8xf32> to vector<1xf32>
      %86 = vector.shape_cast %85 : vector<1xf32> to vector<1x1x1xf32>
      %87 = vector.extract %86[0, 0, 0] : f32 from vector<1x1x1xf32>
      %88 = arith.addf %83, %87 : f32
      %c0_48 = arith.constant 0 : index
      %89 = memref.load %arg11[%c0_48] : memref<1xf32, #tpu.memory_space<smem>>
      memref.store %88, %arg11[%c0_48] : memref<1xf32, #tpu.memory_space<smem>>
    } else {
    }
    %c0_i32_39 = arith.constant 0 : i32
    %68 = arith.cmpi eq, %arg1, %c0_i32_39 : i32
    %c0_i32_40 = arith.constant 0 : i32
    %69 = arith.cmpi eq, %arg2, %c0_i32_40 : i32
    %70 = arith.andi %68, %69 : i1
    %71 = arith.extui %70 : i1 to i32
    %c0_i32_41 = arith.constant 0 : i32
    %72 = arith.cmpi ne, %71, %c0_i32_41 : i32
    scf.if %72 {
      %73 = arith.index_cast %arg0 : i32 to index
      %74 = memref.load %arg3[%73] : memref<6xi32, #tpu.memory_space<smem>>
      %75 = arith.sitofp %74 : i32 to f32
      %c0_42 = arith.constant 0 : index
      %76 = memref.load %arg11[%c0_42] : memref<1xf32, #tpu.memory_space<smem>>
      %77 = arith.divf %76, %75 : f32
      %78 = vector.broadcast %77 : f32 to vector<1x8x128xf32>
      %c0_43 = arith.constant 0 : index
      %c0_44 = arith.constant 0 : index
      %c0_45 = arith.constant 0 : index
      %79 = vector.load %arg8[%c0_43, %c0_44, %c0_45] : memref<1x8x128xf32, #tpu.memory_space<vmem>>, vector<1x8x128xf32>
      tpu.vector_store %arg8[%c0_43, %c0_44, %c0_45], %78 {strides = array<i32>} : memref<1x8x128xf32, #tpu.memory_space<vmem>>, vector<1x8x128xf32>,
    } else {
    }
    return
  }
  func.func @transform_0(%arg0: i32, %arg1: i32, %arg2: i32, %arg3: memref<6xi32, #tpu.memory_space<smem>>) -> (i32, i32, i32) {
    %c0_i32 = arith.constant 0 : i32
    %c0_i32_0 = arith.constant 0 : i32
    return %arg0, %arg1, %c0_i32 : i32, i32, i32
  }
  func.func @transform_1(%arg0: i32, %arg1: i32, %arg2: i32, %arg3: memref<6xi32, #tpu.memory_space<smem>>) -> (i32, i32, i32) {
    %c0_i32 = arith.constant 0 : i32
    %c0_i32_0 = arith.constant 0 : i32
    return %arg0, %arg2, %c0_i32 : i32, i32, i32
  }
  func.func @transform_2(%arg0: i32, %arg1: i32, %arg2: i32, %arg3: memref<6xi32, #tpu.memory_space<smem>>) -> (i32, i32, i32) {
    %c0_i32 = arith.constant 0 : i32
    %c0_i32_0 = arith.constant 0 : i32
    return %arg0, %arg1, %c0_i32 : i32, i32, i32
  }
  func.func @transform_3(%arg0: i32, %arg1: i32, %arg2: i32, %arg3: memref<6xi32, #tpu.memory_space<smem>>) -> (i32, i32, i32) {
    %c0_i32 = arith.constant 0 : i32
    %c0_i32_0 = arith.constant 0 : i32
    return %arg0, %c0_i32, %arg2 : i32, i32, i32
  }
  func.func @transform_4(%arg0: i32, %arg1: i32, %arg2: i32, %arg3: memref<6xi32, #tpu.memory_space<smem>>) -> (i32, i32, i32) {
    %c0_i32 = arith.constant 0 : i32
    %c0_i32_0 = arith.constant 0 : i32
    %c0_i32_1 = arith.constant 0 : i32
    return %arg0, %c0_i32, %c0_i32_0 : i32, i32, i32
  }
}

</mosaic_0001>

<llo_original>
// kernel: tpu_custom_call.1
$region0: #{tpu_custom_call.1}
  #allocation0 [shape = 'u32[]', space=smem, size = 0x4, offset = 0x4, fixed_abs, tag = 'smem constant byte address 0x4 - core index']
  #allocation1 [shape = 'u32[144,128]{1,0:T(1,128)}', space=vmem, size = 0x12000, scoped, tag = 'internal scratch']
  #allocation2 [shape = 'f32[8,1]{1,0:T(8,128)}', space=vmem, size = 0x1000, scoped, tag = 'scratch operand']
  #allocation3 [shape = 'f32[1,1,8]{2,1,0:T(1,128)}', space=vmem, size = 0x200, scoped, tag = 'scratch operand']
  #allocation4 [shape = 'f32[1]{0:T(128)}', space=smem, size = 0x200, scoped, tag = 'scratch operand']
  #allocation5 [shape = 's32[1]{0}', space=sflag, size = 0x4, scoped, tag = 'scoped memory for tpu_custom_call.1']
  #allocation6 [shape = 'u8[512]{0}', space=smem, size = 0x200, scoped, tag = 'prefetched SMEM operand 0']
  %s0 = inlined_call_operand.vmem [shape: s32[6], index: 0, kind: input, shape index: {}]
  %s1 = inlined_call_operand.vmem [shape: f32[6,8,128], index: 1, kind: input, shape index: {}]
  %s2 = inlined_call_operand.hbm [shape: f32[6,8,128], index: 2, kind: input, shape index: {}]
  %s3 = inlined_call_operand.vmem [shape: f32[6,8,1], index: 3, kind: input, shape index: {}]
  %s4 = inlined_call_operand.vmem [shape: f32[6,1,8], index: 4, kind: input, shape index: {}]
  %s5 = inlined_call_operand.hbm [shape: f32[6,8,128], index: 5, kind: output, shape index: {}]
  %s6 = sld [smem:[#allocation0]]
  $region77: #{tpu_custom_call.1} parent=0
    _
  %s8 = ssub.s32 1, %s6
  %s9 = scalar_select 0, %s8, %s6
  %s10 = sshll.u32 %s0, 4
  %s11 = int_to_ptr.vmem [resolvable:$true] %s10
  %13 = dma.vmem_to_smem %s11, 16, [#allocation6], [#allocation5]
  %14 = dma.done [#allocation5], 16
  %15 = sfence
  $region1: #{tpu_custom_call.1} parent=0
    #allocation7 [shape = 'u8[8192]{0}', space=vmem, size = 0x2000, scoped, tag = 'input window, operand 2']
    #allocation8 [shape = 's32[2]{0}', space=sflag, size = 0x8, scoped, tag = 'scoped memory for tpu_custom_call.1']
    #allocation9 [shape = 's32[2]{0}', space=sflag, size = 0x8, scoped, tag = 'scoped memory for tpu_custom_call.1']
    #allocation10 [shape = 'u8[8192]{0}', space=vmem, size = 0x2000, scoped, tag = 'output window, operand 0']
    %16 = vsyncpa [#allocation8], 0
    %s17 = scalar_lea.sflag [#allocation8], 1
    %18 = vsyncpa %s17, 0
    %19 = vsyncpa [#allocation9], 0
    %s20 = scalar_lea.sflag [#allocation9], 1
    %21 = vsyncpa %s20, 0
    loop: start=0, step=1, limit=8
    $region2: #{tpu_custom_call.1} parent=1 // loop_pre_header
      _
    $region3: #{tpu_custom_call.1} parent=1 // loop_header
      %s23 = sphi 0, %s27
      %p24 = scmp.ge.s32.totalorder %s23, 8
      %s30 = sphi 0, %s49
      %s31 = sphi 0, %s45
      %s32 = sphi 0, %s41
      %s33 = sphi 0, %s30
      %s34 = sphi 0, %s31
      %s35 = sphi 0, %s32
      %s36 = sphi 0, %s33
      %s37 = sphi 0, %s34
      %s38 = sphi 0, %s35
      %s54 = sphi 0, %s56
      %s57 = sphi 0, %s54
      %s58 = sphi 0, %s57
      %s74 = sphi 0, %s58
      %s82 = sphi 0, %s84
      %s85 = sphi 0, %s82
      %s86 = sphi 0, %s85
      %s102 = sphi 0, %s86
      %s110 = sphi 0, %s112
      %s113 = sphi 0, %s110
      %s114 = sphi 0, %s113
      %s130 = sphi 0, %s114
      %s138 = sphi 0, %s140
      %s141 = sphi 0, %s138
      %s142 = sphi 0, %s141
      %s158 = sphi 0, %s142
      %s164 = sphi 0, %s166
      %s167 = sphi 0, %s164
      %s168 = sphi 0, %s167
      %s184 = sphi 0, %s168
    $region4: #{tpu_custom_call.1} parent=1 // loop_header_branch
      %26 = sbr.rel (%p24) target = $region8
    $region5: #{tpu_custom_call.1} parent=1 // loop_body
      %s28 = ssub.s32 %s23, 1
      %s29 = ssub.s32 %s23, 2
      %s39 = sadd.s32 1, %s32
      %p40 = scmp.ge.s32.totalorder %s39, 1
      %s41 = scalar_select %p40, 0, %s39
      %s42 = sadd.s32 1, %s31
      %s43 = scalar_select %p40, %s42, %s31
      %p44 = scmp.ge.s32.totalorder %s43, 1
      %s45 = scalar_select %p44, 0, %s43
      %s46 = sadd.s32 1, %s30
      %s47 = scalar_select %p44, %s46, %s30
      %p48 = scmp.ge.s32.totalorder %s47, 6
      %s49 = scalar_select %p48, 0, %s47
      %s50 = ssub.s32 %s30, %s49
      %s51 = ssub.s32 %s31, %s45
      %s52 = sor.u32 %s50, %s51
      %p53 = scmp.eq.s32.totalorder %s52, 0
      %s55 = sadd.s32 %s54, 1
      %s56 = scalar_select %p53, %s54, %s55
      %p59 = pneg %p53
      %p60 = scmp.eq.s32.totalorder %s23, 5
      %p61 = por %p59, %p60
      %p62 = scmp.ne.s32.totalorder %s54, %s57
      %p63 = scmp.eq.s32.totalorder %s23, 0
      %p64 = por %p62, %p63
      %p65 = scmp.ne.s32.totalorder %s54, %s57
      %p66 = scmp.eq.s32.totalorder %s28, 5
      %p67 = por %p65, %p66
      %p68 = scmp.ne.s32.totalorder %s57, %s58
      %p69 = scmp.eq.s32.totalorder %s28, 0
      %p70 = por %p68, %p69
      %p71 = scmp.ne.s32.totalorder %s57, %s58
      %p72 = scmp.eq.s32.totalorder %s29, 5
      %p73 = por %p71, %p72
      %p75 = scmp.ne.s32.totalorder %s58, %s74
      %p76 = scmp.eq.s32.totalorder %s29, 0
      %p77 = por %p75, %p76
      %s78 = ssub.s32 %s30, %s49
      %s79 = ssub.s32 %s32, %s41
      %s80 = sor.u32 %s78, %s79
      %p81 = scmp.eq.s32.totalorder %s80, 0
      %s83 = sadd.s32 %s82, 1
      %s84 = scalar_select %p81, %s82, %s83
      %p87 = pneg %p81
      %p88 = scmp.eq.s32.totalorder %s23, 5
      %p89 = por %p87, %p88
      %p90 = scmp.ne.s32.totalorder %s82, %s85
      %p91 = scmp.eq.s32.totalorder %s23, 0
      %p92 = por %p90, %p91
      %p93 = scmp.ne.s32.totalorder %s82, %s85
      %p94 = scmp.eq.s32.totalorder %s28, 5
      %p95 = por %p93, %p94
      %p96 = scmp.ne.s32.totalorder %s85, %s86
      %p97 = scmp.eq.s32.totalorder %s28, 0
      %p98 = por %p96, %p97
      %p99 = scmp.ne.s32.totalorder %s85, %s86
      %p100 = scmp.eq.s32.totalorder %s29, 5
      %p101 = por %p99, %p100
      %p103 = scmp.ne.s32.totalorder %s86, %s102
      %p104 = scmp.eq.s32.totalorder %s29, 0
      %p105 = por %p103, %p104
      %s106 = ssub.s32 %s30, %s49
      %s107 = ssub.s32 %s31, %s45
      %s108 = sor.u32 %s106, %s107
      %p109 = scmp.eq.s32.totalorder %s108, 0
      %s111 = sadd.s32 %s110, 1
      %s112 = scalar_select %p109, %s110, %s111
      %p115 = pneg %p109
      %p116 = scmp.eq.s32.totalorder %s23, 5
      %p117 = por %p115, %p116
      %p118 = scmp.ne.s32.totalorder %s110, %s113
      %p119 = scmp.eq.s32.totalorder %s23, 0
      %p120 = por %p118, %p119
      %p121 = scmp.ne.s32.totalorder %s110, %s113
      %p122 = scmp.eq.s32.totalorder %s28, 5
      %p123 = por %p121, %p122
      %p124 = scmp.ne.s32.totalorder %s113, %s114
      %p125 = scmp.eq.s32.totalorder %s28, 0
      %p126 = por %p124, %p125
      %p127 = scmp.ne.s32.totalorder %s113, %s114
      %p128 = scmp.eq.s32.totalorder %s29, 5
      %p129 = por %p127, %p128
      %p131 = scmp.ne.s32.totalorder %s114, %s130
      %p132 = scmp.eq.s32.totalorder %s29, 0
      %p133 = por %p131, %p132
      %s134 = ssub.s32 %s30, %s49
      %s135 = ssub.s32 %s32, %s41
      %s136 = sor.u32 %s134, %s135
      %p137 = scmp.eq.s32.totalorder %s136, 0
      %s139 = sadd.s32 %s138, 1
      %s140 = scalar_select %p137, %s138, %s139
      %p143 = pneg %p137
      %p144 = scmp.eq.s32.totalorder %s23, 5
      %p145 = por %p143, %p144
      %p146 = scmp.ne.s32.totalorder %s138, %s141
      %p147 = scmp.eq.s32.totalorder %s23, 0
      %p148 = por %p146, %p147
      %p149 = scmp.ne.s32.totalorder %s138, %s141
      %p150 = scmp.eq.s32.totalorder %s28, 5
      %p151 = por %p149, %p150
      %p152 = scmp.ne.s32.totalorder %s141, %s142
      %p153 = scmp.eq.s32.totalorder %s28, 0
      %p154 = por %p152, %p153
      %p155 = scmp.ne.s32.totalorder %s141, %s142
      %p156 = scmp.eq.s32.totalorder %s29, 5
      %p157 = por %p155, %p156
      %p159 = scmp.ne.s32.totalorder %s142, %s158
      %p160 = scmp.eq.s32.totalorder %s29, 0
      %p161 = por %p159, %p160
      %s162 = ssub.s32 %s30, %s49
      %p163 = scmp.eq.s32.totalorder %s162, 0
      %s165 = sadd.s32 %s164, 1
      %s166 = scalar_select %p163, %s164, %s165
      %p169 = pneg %p163
      %p170 = scmp.eq.s32.totalorder %s23, 5
      %p171 = por %p169, %p170
      %p172 = scmp.ne.s32.totalorder %s164, %s167
      %p173 = scmp.eq.s32.totalorder %s23, 0
      %p174 = por %p172, %p173
      %p175 = scmp.ne.s32.totalorder %s164, %s167
      %p176 = scmp.eq.s32.totalorder %s28, 5
      %p177 = por %p175, %p176
      %p178 = scmp.ne.s32.totalorder %s167, %s168
      %p179 = scmp.eq.s32.totalorder %s28, 0
      %p180 = por %p178, %p179
      %p181 = scmp.ne.s32.totalorder %s167, %s168
      %p182 = scmp.eq.s32.totalorder %s29, 5
      %p183 = por %p181, %p182
      %p185 = scmp.ne.s32.totalorder %s168, %s184
      %p186 = scmp.eq.s32.totalorder %s29, 0
      %p187 = por %p185, %p186
      %p188 = scmp.le.s32.totalorder 1, %s23
      %p189 = scmp.lt.s32.totalorder %s23, 7
      %p190 = pnand %p188, %p189
      %p191 = pneg %p190
      // Predicated region
      $region9: #{tpu_custom_call.1} parent=5 // pred_check
        _
      $region10: #{tpu_custom_call.1} parent=5 // pred_check_branch
        %193 = sbr.rel (%p190) target = $region12
      $region11: #{tpu_custom_call.1} parent=5 // pred_region
        %s194 = ssub.s32 %s23, 1
      $region12: #{tpu_custom_call.1} parent=5 // pred_fallthru
        _
      %p195 = scmp.lt.s32.totalorder %s23, 6
      // Predicated region
      $region13: #{tpu_custom_call.1} parent=5 // pred_check
        %p196 = pneg %p195
      $region14: #{tpu_custom_call.1} parent=5 // pred_check_branch
        %198 = sbr.rel (%p196) target = $region16
      $region15: #{tpu_custom_call.1} parent=5 // pred_region
        // Predicated region
        $region17: #{tpu_custom_call.1} parent=15 // pred_check
          %p199 = pneg %p64
        $region18: #{tpu_custom_call.1} parent=15 // pred_check_branch
          %201 = sbr.rel (%p199) target = $region20
        $region19: #{tpu_custom_call.1} parent=15 // pred_region
          %p202 = scmp.lt.s32.totalorder %s30, 5
          %s203 = scalar_select %p202, %s30, 5
          %p204 = scmp.lt.s32.totalorder %s31, 0
          %s205 = scalar_select %p204, %s31, 0
          %s206 = sadd.s32 %s205, %s203
          %s207 = smul.addr %s206, 8
          %s208 = scalar_lea.vmem %s1, %s207
        $region20: #{tpu_custom_call.1} parent=15 // pred_fallthru
          _
        // Predicated region
        $region21: #{tpu_custom_call.1} parent=15 // pred_check
          %p209 = pneg %p92
        $region22: #{tpu_custom_call.1} parent=15 // pred_check_branch
          %211 = sbr.rel (%p209) target = $region24
        $region23: #{tpu_custom_call.1} parent=15 // pred_region
          %s212 = sand.u32 %s82, 1
          %s213 = scalar_lea.sflag [#allocation8], %s212
          %s214 = sand.u32 %s82, 1
          %s215 = smul.addr %s214, 8
          %s216 = scalar_lea.vmem [#allocation7], %s215
          %s218 = ssub.s32 128, 128
          %219 = vsyncadd %s213, %s218
          %s220 = sadd.s32 %s32, %s30
          %s221 = smul.addr %s220, 128
          %s222 = scalar_lea.hbm %s2, %s221
          %s224 = sshll.u32 %s216, 4
          %s225 = int_to_ptr.vmem [resolvable:$true] %s224
          %227 = dma.hbm_to_vmem [thread:$0]  %s222, 128, %s225, %s213
        $region24: #{tpu_custom_call.1} parent=15 // pred_fallthru
          _
        // Predicated region
        $region25: #{tpu_custom_call.1} parent=15 // pred_check
          %p228 = pneg %p120
        $region26: #{tpu_custom_call.1} parent=15 // pred_check_branch
          %230 = sbr.rel (%p228) target = $region28
        $region27: #{tpu_custom_call.1} parent=15 // pred_region
          %p231 = scmp.lt.s32.totalorder %s30, 5
          %s232 = scalar_select %p231, %s30, 5
          %p233 = scmp.lt.s32.totalorder %s31, 0
          %s234 = scalar_select %p233, %s31, 0
          %s235 = sadd.s32 %s234, %s232
          %s236 = smul.addr %s235, 8
          %s237 = scalar_lea.vmem %s3, %s236
        $region28: #{tpu_custom_call.1} parent=15 // pred_fallthru
          _
        // Predicated region
        $region29: #{tpu_custom_call.1} parent=15 // pred_check
          %p238 = pneg %p148
        $region30: #{tpu_custom_call.1} parent=15 // pred_check_branch
          %240 = sbr.rel (%p238) target = $region32
        $region31: #{tpu_custom_call.1} parent=15 // pred_region
          %p241 = scmp.lt.s32.totalorder %s30, 5
          %s242 = scalar_select %p241, %s30, 5
          %p243 = scmp.lt.s32.totalorder %s32, 0
          %s244 = scalar_select %p243, %s32, 0
          %s245 = sadd.s32 %s244, %s242
          %s246 = scalar_lea.vmem %s4, %s245
        $region32: #{tpu_custom_call.1} parent=15 // pred_fallthru
          _
      $region16: #{tpu_custom_call.1} parent=5 // pred_fallthru
        _
      %p247 = scmp.le.s32.totalorder 1, %s23
      %p248 = scmp.lt.s32.totalorder %s23, 7
      %p249 = pnand %p247, %p248
      %p250 = pneg %p249
      // Predicated region
      $region33: #{tpu_custom_call.1} parent=5 // pred_check
        _
      $region34: #{tpu_custom_call.1} parent=5 // pred_check_branch
        %252 = sbr.rel (%p249) target = $region36
      $region35: #{tpu_custom_call.1} parent=5 // pred_region
        %s253 = ssub.s32 %s23, 1
        %s254 = sand.u32 %s85, 1
        %s255 = scalar_lea.sflag [#allocation8], %s254
        %s256 = sand.u32 %s85, 1
        %s257 = smul.addr %s256, 8
        %s258 = scalar_lea.vmem [#allocation7], %s257
        // Predicated region
        $region37: #{tpu_custom_call.1} parent=35 // pred_check
          %p259 = pneg %p98
        $region38: #{tpu_custom_call.1} parent=35 // pred_check_branch
          %261 = sbr.rel (%p259) target = $region40
        $region39: #{tpu_custom_call.1} parent=35 // pred_region
          %262 = dma.done %s255, 128
        $region40: #{tpu_custom_call.1} parent=35 // pred_fallthru
          _
        %p263 = scmp.lt.s32.totalorder %s33, 5
        %s264 = scalar_select %p263, %s33, 5
        %p265 = scmp.lt.s32.totalorder %s34, 0
        %s266 = scalar_select %p265, %s34, 0
        %s267 = sadd.s32 %s266, %s264
        %s268 = smul.addr %s267, 8
        %s269 = scalar_lea.vmem %s1, %s268
        %p270 = pneg %p70
        %p271 = pneg %p67
        %s272 = sand.u32 %s85, 1
        %s273 = scalar_lea.sflag [#allocation8], %s272
        %s274 = sand.u32 %s85, 1
        %s275 = smul.addr %s274, 8
        %s276 = scalar_lea.vmem [#allocation7], %s275
        %p277 = pneg %p98
        %p278 = pneg %p95
        %p279 = scmp.lt.s32.totalorder %s33, 5
        %s280 = scalar_select %p279, %s33, 5
        %p281 = scmp.lt.s32.totalorder %s34, 0
        %s282 = scalar_select %p281, %s34, 0
        %s283 = sadd.s32 %s282, %s280
        %s284 = smul.addr %s283, 8
        %s285 = scalar_lea.vmem %s3, %s284
        %p286 = pneg %p126
        %p287 = pneg %p123
        %p288 = scmp.lt.s32.totalorder %s33, 5
        %s289 = scalar_select %p288, %s33, 5
        %p290 = scmp.lt.s32.totalorder %s35, 0
        %s291 = scalar_select %p290, %s35, 0
        %s292 = sadd.s32 %s291, %s289
        %s293 = scalar_lea.vmem %s4, %s292
        %p294 = pneg %p154
        %p295 = pneg %p151
        %p296 = pneg %p180
        %p297 = pneg %p177
        %s298 = sand.u32 %s167, 1
        %s299 = scalar_lea.sflag [#allocation9], %s298
        %s300 = sand.u32 %s167, 1
        %s301 = smul.addr %s300, 8
        %s302 = scalar_lea.vmem [#allocation10], %s301
        %p303 = scmp.lt.s32.totalorder %s33, 5
        %s304 = scalar_select %p303, %s33, 5
        %p305 = scmp.lt.s32.totalorder %s34, 0
        %s306 = scalar_select %p305, %s34, 0
        %s307 = sadd.s32 %s306, %s304
        %s308 = smul.addr %s307, 8
        %s309 = scalar_lea.vmem %s1, %s308
        %p310 = scmp.lt.s32.totalorder %s33, 5
        %s311 = scalar_select %p310, %s33, 5
        %p312 = scmp.lt.s32.totalorder %s34, 0
        %s313 = scalar_select %p312, %s34, 0
        %s314 = sadd.s32 %s313, %s311
        %s315 = smul.addr %s314, 8
        %s316 = scalar_lea.vmem %s3, %s315
        %p317 = scmp.lt.s32.totalorder %s33, 5
        %s318 = scalar_select %p317, %s33, 5
        %p319 = scmp.lt.s32.totalorder %s35, 0
        %s320 = scalar_select %p319, %s35, 0
        %s321 = sadd.s32 %s320, %s318
        %s322 = scalar_lea.vmem %s4, %s321
        %p323 = scmp.eq.s32.totalorder %s34, 0
        %p324 = scmp.eq.s32.totalorder %s35, 0
        %p325 = pnand %p323, %p324
        %p326 = pneg %p325
        // Predicated region
        $region41: #{tpu_custom_call.1} parent=35 // pred_check
          _
        $region42: #{tpu_custom_call.1} parent=35 // pred_check_branch
          %328 = sbr.rel (%p325) target = $region44
        $region43: #{tpu_custom_call.1} parent=35 // pred_region
          %s329 = scalar_lea.smem [#allocation4], 0
          %330 = sst [smem:[%s329]] 0.0
          %vm331 = vcmask 57344
          %332 = vst.msk [vmem:[#allocation3] sm:$0x1] %vm331, 0.0
        $region44: #{tpu_custom_call.1} parent=35 // pred_fallthru
          _
        // Predicated region
        $region45: #{tpu_custom_call.1} parent=35 // pred_check
          %p333 = pneg %p324
        $region46: #{tpu_custom_call.1} parent=35 // pred_check_branch
          %335 = sbr.rel (%p333) target = $region48
        $region47: #{tpu_custom_call.1} parent=35 // pred_region
          %vm336 = vcmask 7168
          %337 = vst.msk [vmem:[#allocation2] sm:$0xff] %vm336, 0.0
        $region48: #{tpu_custom_call.1} parent=35 // pred_fallthru
          _
        %v338 = vld [vmem:[%s309] sm:$0xff]
        %v339 = vld [vmem:[%s258] sm:$0xff]
        %v340 = vld [vmem:[%s316] sm:$0xff]
        %v341 = vld [vmem:[%s322] sm:$0x1]
        %v342 = vmul.f32 %v338, %v338
        %343 = vadd.xlane.f32.xlu0 %v342
        %v344 = vpop.xlane.xlu0 %343
        %v345 = vrsqrt.pop %v344
        %v346 = vmul.f32 %v344, %v345
        %vm347 = vcmp.eq.f32.partialorder %v344, inf
        %v348 = vsel %vm347, %v344, %v346
        %vm349 = vcmp.eq.f32.partialorder %v344, 0.0
        %v350 = vand.u32 %v344, 2147483648
        %v351 = vsel %vm349, %v350, %v348
        %v352 = vmax.f32 %v351, 1e-08
        %v353 = vrcp.pop %v352
        %v354 = vmul.f32 20.0, %v353
        %v355 = vmul.f32 %v338, %v354
        %v356 = vmul.f32 %v339, %v339
        %357 = vadd.xlane.f32.xlu0 %v356
        %v358 = vpop.xlane.xlu0 %357
        %v359 = vrsqrt.pop %v358
        %v360 = vmul.f32 %v358, %v359
        %vm361 = vcmp.eq.f32.partialorder %v358, inf
        %v362 = vsel %vm361, %v358, %v360
        %vm363 = vcmp.eq.f32.partialorder %v358, 0.0
        %v364 = vand.u32 %v358, 2147483648
        %v365 = vsel %vm363, %v364, %v362
        %v366 = vmax.f32 %v365, 1e-08
        %v367 = vrcp.pop %v366
        %v368 = vmul.f32 1.0, %v367
        %v369 = vmul.f32 %v339, %v368
        %370 = vmatprep.subr.mxu0 0.0
        %371 = vmatpush1.xpose.msra.mxu0 0.0
        %372 = vmatprep.subr.mxu0 0.0
        %373 = vmatpush1.xpose.msra.mxu0 0.0
        %374 = vmatprep.subr.mxu0 0.0
        %375 = vmatpush1.xpose.msra.mxu0 0.0
        %376 = vmatprep.subr.mxu0 0.0
        %377 = vmatpush1.xpose.msra.mxu0 0.0
        %378 = vmatprep.subr.mxu0 0.0
        %379 = vmatpush1.xpose.msra.mxu0 0.0
        %380 = vmatprep.subr.mxu0 0.0
        %381 = vmatpush1.xpose.msra.mxu0 0.0
        %382 = vmatprep.subr.mxu0 0.0
        %383 = vmatpush1.xpose.msra.mxu0 0.0
        %384 = vmatprep.subr.mxu0 0.0
        %385 = vmatpush1.xpose.msra.mxu0 0.0
        %386 = vmatprep.subr.mxu0 0.0
        %387 = vmatpush1.xpose.msra.mxu0 0.0
        %388 = vmatprep.subr.mxu0 0.0
        %389 = vmatpush1.xpose.msra.mxu0 0.0
        %390 = vmatprep.subr.mxu0 0.0
        %391 = vmatpush1.xpose.msra.mxu0 0.0
        %392 = vmatprep.subr.mxu0 0.0
        %393 = vmatpush1.xpose.msra.mxu0 0.0
        %394 = vmatprep.subr.mxu0 0.0
        %395 = vmatpush1.xpose.msra.mxu0 0.0
        %396 = vmatprep.subr.mxu0 0.0
        %397 = vmatpush1.xpose.msra.mxu0 0.0
        %398 = vmatprep.subr.mxu0 0.0
        %399 = vmatpush1.xpose.msra.mxu0 0.0
        %400 = vmatprep.subr.mxu0 0.0
        %401 = vmatpush1.xpose.msra.mxu0 %v369
        %402 = vmatprep.subr.mxu0 0.0
        %403 = vmatpush2.xpose.msra.mxu0 0.0
        %404 = vmatprep.subr.mxu0 0.0
        %405 = vmatpush2.xpose.msra.mxu0 0.0
        %406 = vmatprep.subr.mxu0 0.0
        %407 = vmatpush2.xpose.msra.mxu0 0.0
        %408 = vmatprep.subr.mxu0 0.0
        %409 = vmatpush2.xpose.msra.mxu0 0.0
        %410 = vmatprep.subr.mxu0 0.0
        %411 = vmatpush2.xpose.msra.mxu0 0.0
        %412 = vmatprep.subr.mxu0 0.0
        %413 = vmatpush2.xpose.msra.mxu0 0.0
        %414 = vmatprep.subr.mxu0 0.0
        %415 = vmatpush2.xpose.msra.mxu0 0.0
        %416 = vmatprep.subr.mxu0 0.0
        %417 = vmatpush2.xpose.msra.mxu0 0.0
        %418 = vmatprep.subr.mxu0 0.0
        %419 = vmatpush2.xpose.msra.mxu0 0.0
        %420 = vmatprep.subr.mxu0 0.0
        %421 = vmatpush2.xpose.msra.mxu0 0.0
        %422 = vmatprep.subr.mxu0 0.0
        %423 = vmatpush2.xpose.msra.mxu0 0.0
        %424 = vmatprep.subr.mxu0 0.0
        %425 = vmatpush2.xpose.msra.mxu0 0.0
        %426 = vmatprep.subr.mxu0 0.0
        %427 = vmatpush2.xpose.msra.mxu0 0.0
        %428 = vmatprep.subr.mxu0 0.0
        %429 = vmatpush2.xpose.msra.mxu0 0.0
        %430 = vmatprep.subr.mxu0 0.0
        %431 = vmatpush2.xpose.msra.mxu0 0.0
        %432 = vmatprep.subr.mxu0 0.0
        %433 = vmatpush2.xpose.msra.mxu0 0.0
        %434 = vmatprep.mubr.f32.mxu0 0.0
        %435 = vmatmul.mubr.f32.gmra.mxu0 %v355
        %v436 = vpop.f32.mrf.mxu0
        %v437 = vadd.f32 0.0, %v436
        %v438 = vpop.f32.mrf.mxu0
        %439 = vdwg.mxu0
        %v440 = vsub.f32 %v437, 20.0
        %v441 = vmul.f32 %v440, 1.442695
        %v442 = vpow.pop %v441
        %v444 = vlaneseq
        %v445 = vshrl.u32 %v444, 7
        %v446 = vsub.s32 0, %v445
        %v447 = vrot.slane %v341, %v446
        %v449 = vmul.f32 %v442, %v447
        %451 = vset.pattern.permute.xlu0 0
        %452 = vperm.xlu0 %451, %v340
        %v453 = vpop.permute.xlu0 %452
        %v455 = vmul.f32 %v449, %v453
        %v456 = vld [vmem:[#allocation2] sm:$0xff]
        %vm457 = vcmask 64512
        %v458 = vsel %vm457, %v455, 0.0
        %459 = vadd.xlane.f32.xlu0 %v458
        %v460 = vpop.xlane.xlu0 %459
        %v461 = vadd.f32 %v456, %v460
        %vm462 = vcmask 7168
        %463 = vst.msk [vmem:[#allocation2] sm:$0xff] %vm462, %v461
        %s464 = scalar_lea.vmem [#allocation3], %s35
        %v465 = vld [vmem:[%s464] sm:$0x1]
        %v466 = vrot.slane %v458, 4
        %v467 = vadd.f32 %v458, %v466
        %v468 = vrot.slane %v467, 2
        %v469 = vadd.f32 %v467, %v468
        %v470 = vrot.slane %v469, 1
        %v471 = vadd.f32 %v469, %v470
        %v472 = vadd.f32 %v465, %v471
        %vm473 = vcmask 57344
        %474 = vst.msk [vmem:[%s464] sm:$0x1] %vm473, %v472
        %p475 = scmp.eq.s32.totalorder %s34, %s35
        // Predicated region
        $region49: #{tpu_custom_call.1} parent=35 // pred_check
          %p476 = pneg %p475
        $region50: #{tpu_custom_call.1} parent=35 // pred_check_branch
          %478 = sbr.rel (%p476) target = $region52
        $region51: #{tpu_custom_call.1} parent=35 // pred_region
          %v479 = vmul.f32 %v355, %v369
          %480 = vadd.xlane.f32.xlu0 %v479
          %v481 = vpop.xlane.xlu0 %480
          %v482 = vmul.f32 %v481, %v340
          %s483 = sld [smem:[#allocation4]]
          %v484 = vsel %vm462, %v482, 0.0
          %485 = vadd.xlane.f32.xlu0 %v484
          %v486 = vpop.xlane.xlu0 %485
          %v487 = vrot.slane %v486, 4
          %v488 = vadd.f32 %v486, %v487
          %v489 = vrot.slane %v488, 2
          %v490 = vadd.f32 %v488, %v489
          %v491 = vrot.slane %v490, 1
          %v492 = vadd.f32 %v490, %v491
          %s493 = vtos %v492
          %s494 = smul.f32 %s493, -2.0
          %s495 = sadd.f32 %s483, %s494
          %s496 = scalar_lea.smem [#allocation4], 0
          %497 = sst [smem:[%s496]] %s495
        $region52: #{tpu_custom_call.1} parent=35 // pred_fallthru
          _
        // Predicated region
        $region53: #{tpu_custom_call.1} parent=35 // pred_check
          %p498 = pneg %p324
        $region54: #{tpu_custom_call.1} parent=35 // pred_check_branch
          %500 = sbr.rel (%p498) target = $region56
        $region55: #{tpu_custom_call.1} parent=35 // pred_region
          %vm501 = vcmp.gt.f32.partialorder %v340, 0.0
          %v502 = vld [vmem:[#allocation2] sm:$0xff]
          %v503 = vlog2.pop %v502
          %v504 = vmul.f32 %v503, 0.6931472
          %v505 = vadd.f32 %v504, 20.0
          %v506 = vsel %vm501, %v505, 0.0
          %s507 = sld [smem:[#allocation4]]
          %v508 = vsel %vm462, %v506, 0.0
          %509 = vadd.xlane.f32.xlu0 %v508
          %v510 = vpop.xlane.xlu0 %509
          %v511 = vrot.slane %v510, 4
          %v512 = vadd.f32 %v510, %v511
          %v513 = vrot.slane %v512, 2
          %v514 = vadd.f32 %v512, %v513
          %v515 = vrot.slane %v514, 1
          %v516 = vadd.f32 %v514, %v515
          %s517 = vtos %v516
          %s518 = sadd.f32 %s507, %s517
          %s519 = scalar_lea.smem [#allocation4], 0
          %520 = sst [smem:[%s519]] %s518
        $region56: #{tpu_custom_call.1} parent=35 // pred_fallthru
          _
        // Predicated region
        $region57: #{tpu_custom_call.1} parent=35 // pred_check
          %p521 = pneg %p323
        $region58: #{tpu_custom_call.1} parent=35 // pred_check_branch
          %523 = sbr.rel (%p521) target = $region60
        $region59: #{tpu_custom_call.1} parent=35 // pred_region
          %vm524 = vcmp.gt.f32.partialorder %v341, 0.0
          %v525 = vld [vmem:[%s464] sm:$0x1]
          %v526 = vlog2.pop %v525
          %v527 = vmul.f32 %v526, 0.6931472
          %v528 = vadd.f32 %v527, 20.0
          %v529 = vsel %vm524, %v528, 0.0
          %s530 = sld [smem:[#allocation4]]
          %v531 = vsel %vm473, %v529, 0.0
          %532 = vadd.xlane.f32.xlu0 %v531
          %v533 = vpop.xlane.xlu0 %532
          %v534 = vrot.slane %v533, 4
          %v535 = vadd.f32 %v533, %v534
          %v536 = vrot.slane %v535, 2
          %v537 = vadd.f32 %v535, %v536
          %v538 = vrot.slane %v537, 1
          %v539 = vadd.f32 %v537, %v538
          %s540 = vtos %v539
          %s541 = sadd.f32 %s530, %s540
          %s542 = scalar_lea.smem [#allocation4], 0
          %543 = sst [smem:[%s542]] %s541
        $region60: #{tpu_custom_call.1} parent=35 // pred_fallthru
          _
        // Predicated region
        $region61: #{tpu_custom_call.1} parent=35 // pred_check
          _
        $region62: #{tpu_custom_call.1} parent=35 // pred_check_branch
          %545 = sbr.rel (%p325) target = $region64
        $region63: #{tpu_custom_call.1} parent=35 // pred_region
          %s546 = sld [smem:[#allocation6 + %s33]]
          %s547 = scvt.s32.f32 %s546
          %s548 = sld [smem:[#allocation4]]
          %v549 = vstv %s547
          %v550 = vrcp.pop %v549
          %s551 = vtos %v550
          %s552 = smul.f32 %s548, %s551
          %v553 = vstv %s552
          %554 = vst [vmem:[%s302] sm:$0xff] %v553
        $region64: #{tpu_custom_call.1} parent=35 // pred_fallthru
          _
        %s555 = sand.u32 %s167, 1
        %s556 = scalar_lea.sflag [#allocation9], %s555
        %s557 = sand.u32 %s167, 1
        %s558 = smul.addr %s557, 8
        %s559 = scalar_lea.vmem [#allocation10], %s558
        // Predicated region
        $region65: #{tpu_custom_call.1} parent=35 // pred_check
          %p560 = pneg %p177
        $region66: #{tpu_custom_call.1} parent=35 // pred_check_branch
          %562 = sbr.rel (%p560) target = $region68
        $region67: #{tpu_custom_call.1} parent=35 // pred_region
          %s564 = ssub.s32 128, 128
          %565 = vsyncadd %s556, %s564
          %s566 = smul.addr %s33, 128
          %s567 = scalar_lea.hbm %s5, %s566
          %s569 = sshll.u32 %s559, 4
          %s570 = int_to_ptr.vmem [resolvable:$true] %s569
          %572 = dma.vmem_to_hbm [thread:$0]  %s570, 128, %s567, %s556
        $region68: #{tpu_custom_call.1} parent=35 // pred_fallthru
          _
      $region36: #{tpu_custom_call.1} parent=5 // pred_fallthru
        _
      %p573 = scmp.le.s32.totalorder 2, %s23
      // Predicated region
      $region69: #{tpu_custom_call.1} parent=5 // pred_check
        %p574 = pneg %p573
      $region70: #{tpu_custom_call.1} parent=5 // pred_check_branch
        %576 = sbr.rel (%p574) target = $region72
      $region71: #{tpu_custom_call.1} parent=5 // pred_region
        %s577 = ssub.s32 %s23, 2
        // Predicated region
        $region73: #{tpu_custom_call.1} parent=71 // pred_check
          %p578 = pneg %p183
        $region74: #{tpu_custom_call.1} parent=71 // pred_check_branch
          %580 = sbr.rel (%p578) target = $region76
        $region75: #{tpu_custom_call.1} parent=71 // pred_region
          %s581 = sand.u32 %s168, 1
          %s582 = scalar_lea.sflag [#allocation9], %s581
          %s583 = sand.u32 %s168, 1
          %s584 = smul.addr %s583, 8
          %s585 = scalar_lea.vmem [#allocation10], %s584
          %586 = dma.done %s582, 128
        $region76: #{tpu_custom_call.1} parent=71 // pred_fallthru
          _
      $region72: #{tpu_custom_call.1} parent=5 // pred_fallthru
        _
    $region6: #{tpu_custom_call.1} parent=1 // loop_footer
      %s27 = sadd.s32 1, %s23
    $region7: #{tpu_custom_call.1} parent=1 // loop_footer_branch
      %22 = sbr.rel target = $region3
    $region8: #{tpu_custom_call.1} parent=1 // loop_exit
      _
    %587 = vsyncpa [#allocation8], 1
    %s588 = scalar_lea.sflag [#allocation8], 1
    %589 = vsyncpa %s588, 1
    %590 = vsyncpa [#allocation9], 1
    %s591 = scalar_lea.sflag [#allocation9], 1
    %592 = vsyncpa %s591, 1

</llo_original>
